<compile_context>
chip_gen: v7x
topology: tpu7x:2x2x1
jax: 0.10.0
libtpu: 0.0.40
codegen_flags: <defaults>
</compile_context>

<pallas_src>
import jax
import jax.numpy as jnp
from jax import lax
from jax.experimental import pallas as pl
from jax.experimental.pallas import tpu as pltpu


def _style_modulation_kernel(x_ref, posq_ref, wqpT_ref, kproj_ref, vT_ref,
                             expT_ref, out_ref, style_ref):
    x = x_ref[0]                                   # [Cx, tT]  f32, channel-major

    # demodulate(x, 'LN') over the channel axis (sublane axis here).
    mu = jnp.mean(x, axis=0, keepdims=True)        # [1, tT]
    xc = x - mu
    xd = xc * lax.rsqrt(jnp.sum(xc * xc, axis=0, keepdims=True) + 1e-8)

    # q^T = Wqp^T @ xd + pos_q^T   (pooling, Wq and the attention scale are
    # folded into Wqp / pos_q by the wrapper).
    q = jnp.dot(wqpT_ref[...], xd, preferred_element_type=jnp.float32)      # [Cd, tT]
    q = q + posq_ref[...]

    # attention logits over style keys: dots^T = Kproj @ q^T, softmax over styles.
    dots = jnp.dot(kproj_ref[...], q, preferred_element_type=jnp.float32)   # [S, tT]
    dots = dots - jnp.max(dots, axis=0, keepdims=True)
    e = jnp.exp(dots)
    attn = e * pl.reciprocal(jnp.sum(e, axis=0, keepdims=True), approx=True)

    # new_style^T = V^T @ attn^T  -> [Cd, tT]
    ns = jnp.dot(vT_ref[0], attn, preferred_element_type=jnp.float32)

    # style_mod == 'prod': broadcast each style channel over its patch**2 group.
    mod = jnp.dot(expT_ref[...], ns, preferred_element_type=jnp.float32)    # [Cx, tT]
    out_ref[0] = xd * mod
    style_ref[0] = ns


def _pick_token_tile(T):
    """Largest lane-aligned tile (<=1024, multiple of 128) dividing T, else T."""
    for tT in (1024, 512, 256, 128):
        if T % tT == 0:
            return tT
    return T


def style_modulation(x_nchw, s, params, *, patch_size, content_dim):
    """Returns (out:[B,Cx,H,W], new_style:[B,T,content_dim])."""
    B, Cx, H, W = x_nchw.shape
    T = H * W
    S, Sd = s.shape[1], s.shape[2]
    Cd = content_dim
    pp = patch_size * patch_size
    assert Cx == Cd * pp

    # NCHW -> channel-major [B, Cx, T] is a free reshape (no HBM transpose pass).
    x_bct = x_nchw.reshape(B, Cx, T).astype(jnp.float32)

    keys, pos, wq, wk, wv = (params["keys"], params["pos"], params["wq"],
                             params["wk"], params["wv"])
    attn_scale = float(Cd) ** (-0.5)

    # Channel-group pooling / expansion matrices (identity when patch_size==1).
    groups = jnp.arange(Cx) // pp
    onehot = (groups[:, None] == jnp.arange(Cd)[None, :]).astype(jnp.float32)  # [Cx, Cd]
    pool = onehot / pp

    # Hoisted batch/token-invariant projections; attention scale folded into q.
    wqpT = (attn_scale * (pool @ wq)).T                        # [Cd, Cx]
    pos_qT = (attn_scale * (pos @ wq)).T                       # [Cd, T]
    k_proj = keys @ wk                                         # [S, Cd]
    vT = jnp.einsum("bsd,dc->bcs", s.astype(jnp.float32), wv)  # [B, Cd, S]
    expT = onehot                                              # [Cx, Cd]

    tT = _pick_token_tile(T)
    nT = T // tT

    out_bct, style_bct = pl.pallas_call(
        _style_modulation_kernel,
        out_shape=(jax.ShapeDtypeStruct((B, Cx, T), jnp.float32),
                   jax.ShapeDtypeStruct((B, Cd, T), jnp.float32)),
        grid=(B, nT),
        in_specs=[
            pl.BlockSpec((1, Cx, tT), lambda b, t: (b, 0, t)),   # x (channel-major)
            pl.BlockSpec((Cd, tT), lambda b, t: (0, t)),         # pos_q^T
            pl.BlockSpec((Cd, Cx), lambda b, t: (0, 0)),         # Wqp^T
            pl.BlockSpec((S, Cd), lambda b, t: (0, 0)),          # keys @ Wk
            pl.BlockSpec((1, Cd, S), lambda b, t: (b, 0, 0)),    # (s @ Wv)^T
            pl.BlockSpec((Cx, Cd), lambda b, t: (0, 0)),         # expand^T
        ],
        out_specs=(pl.BlockSpec((1, Cx, tT), lambda b, t: (b, 0, t)),
                   pl.BlockSpec((1, Cd, tT), lambda b, t: (b, 0, t))),
        compiler_params=pltpu.CompilerParams(
            dimension_semantics=("parallel", "parallel")),
    )(x_bct, pos_qT, wqpT, k_proj, vT, expT)

    out = out_bct.reshape(B, Cx, H, W)                 # free reshape
    new_style = jnp.transpose(style_bct, (0, 2, 1))    # small tensor: [B, T, Cd]
    return out, new_style


def _reference(x_nchw, s, params, *, patch_size, content_dim):
    """Pure-JAX re-implementation of the PyTorch forward, for checking."""
    B, Cx, H, W = x_nchw.shape
    T = H * W
    p = patch_size
    x = jnp.transpose(x_nchw.reshape(B, Cx, T), (0, 2, 1))
    mu = jnp.mean(x, axis=-1, keepdims=True)
    xc = x - mu
    xd = xc * lax.rsqrt(jnp.sum(xc * xc, axis=-1, keepdims=True) + 1e-8)
    x5 = xd.reshape(B, T, content_dim, p, p)
    query = jnp.mean(x5, axis=(3, 4))
    q_in = query + params["pos"][None]
    q = q_in @ params["wq"]
    k = params["keys"] @ params["wk"]
    v = s @ params["wv"]
    dots = jnp.einsum("btc,sc->bts", q, k) * (content_dim ** -0.5)
    attn = jax.nn.softmax(dots, axis=-1)
    new_style = jnp.einsum("bts,bsc->btc", attn, v)
    out = x5 * new_style[..., None, None]
    out = jnp.transpose(out.reshape(B, T, Cx), (0, 2, 1)).reshape(B, Cx, H, W)
    return out, new_style


def make_params(key, *, content_dim, style_num, style_dim):
    """Deterministic parameter init mirroring StyleModulation.__init__."""
    k1, k2, k3, k4 = jax.random.split(key, 4)
    # keys: orthogonal init, shape [style_num, content_dim]
    g = jax.random.normal(k1, (content_dim, style_num), jnp.float32)
    qmat, _ = jnp.linalg.qr(g)                      # [content_dim, style_num]
    keys = qmat.T.astype(jnp.float32)               # rows orthonormal
    pos = jnp.zeros((0, content_dim), jnp.float32)  # placeholder, set by caller
    # EqualizedLinear weights, stored as [in, out], with the 1/sqrt(fan_in)
    # equalization scale folded in.
    wq = jax.random.normal(k2, (content_dim, content_dim), jnp.float32) / jnp.sqrt(content_dim)
    wk = jax.random.normal(k3, (content_dim, content_dim), jnp.float32) / jnp.sqrt(content_dim)
    wv = jax.random.normal(k4, (style_dim, content_dim), jnp.float32) / jnp.sqrt(style_dim)
    return {"keys": keys, "pos": pos, "wq": wq, "wk": wk, "wv": wv}


if __name__ == "__main__":
    # Small, self-consistent config:
    #   size=16, patch_size=2 -> H = W = size//patch = 8, T = 64
    #   content_dim=32 -> x channel dim Cx = content_dim * patch**2 = 128
    B, size, patch, Cd, Sn, Sd = 2, 16, 2, 32, 8, 32
    Hs = size // patch
    Cx = Cd * patch * patch

    key = jax.random.PRNGKey(0)
    kx, ks, kp = jax.random.split(key, 3)
    x = jax.random.normal(kx, (B, Cx, Hs, Hs), jnp.float32)
    s = jax.random.normal(ks, (B, Sn, Sd), jnp.float32)

    params = make_params(kp, content_dim=Cd, style_num=Sn, style_dim=Sd)
    params["pos"] = jnp.zeros((Hs * Hs, Cd), jnp.float32)  # as in __init__ (zeros)

    out, new_style = style_modulation(x, s, params, patch_size=patch, content_dim=Cd)
    out = jax.block_until_ready(out)
    new_style = jax.block_until_ready(new_style)

    out_ref, style_ref = _reference(x, s, params, patch_size=patch, content_dim=Cd)
    assert out.shape == (B, Cx, Hs, Hs) and new_style.shape == (B, Hs * Hs, Cd)
    # slightly relaxed tolerance: softmax denominator uses the EUP approximate
    # reciprocal (pl.reciprocal(..., approx=True)).
    assert jnp.allclose(out, out_ref, atol=2e-3, rtol=2e-3)
    assert jnp.allclose(new_style, style_ref, atol=2e-3, rtol=2e-3)

    print("KERNEL_OK")
</pallas_src>

<mosaic_0001>
module attributes {stable_mosaic.version = 11 : i64} {
  func.func @_style_modulation_kernel(%arg0: i32, %arg1: i32, %arg2: memref<1x128x64xf32, #tpu.memory_space<vmem>>, %arg3: memref<32x64xf32, #tpu.memory_space<vmem>>, %arg4: memref<32x128xf32, #tpu.memory_space<vmem>>, %arg5: memref<8x32xf32, #tpu.memory_space<vmem>>, %arg6: memref<1x32x8xf32, #tpu.memory_space<vmem>>, %arg7: memref<128x32xf32, #tpu.memory_space<vmem>>, %arg8: memref<1x128x64xf32, #tpu.memory_space<vmem>>, %arg9: memref<1x32x64xf32, #tpu.memory_space<vmem>>) attributes {dimension_semantics = [#tpu.dimension_semantics<parallel>, #tpu.dimension_semantics<parallel>], iteration_bounds = array<i64: 2, 1>, scalar_prefetch = 0 : i64, scratch_operands = 0 : i64, tpu.core_type = #tpu.core_type<tc>, window_params = [{transform_indices = @transform_0, window_bounds = array<i64: 1, 128, 64>}, {transform_indices = @transform_1, window_bounds = array<i64: 32, 64>}, {pipeline_mode = #tpu.pipeline_mode<synchronous>, transform_indices = @transform_2, window_bounds = array<i64: 32, 128>}, {pipeline_mode = #tpu.pipeline_mode<synchronous>, transform_indices = @transform_3, window_bounds = array<i64: 8, 32>}, {transform_indices = @transform_4, window_bounds = array<i64: 1, 32, 8>}, {pipeline_mode = #tpu.pipeline_mode<synchronous>, transform_indices = @transform_5, window_bounds = array<i64: 128, 32>}, {transform_indices = @transform_6, window_bounds = array<i64: 1, 128, 64>}, {transform_indices = @transform_7, window_bounds = array<i64: 1, 32, 64>}]} {
    %c0 = arith.constant 0 : index
    %c0_0 = arith.constant 0 : index
    %c0_1 = arith.constant 0 : index
    %0 = vector.load %arg2[%c0, %c0_0, %c0_1] : memref<1x128x64xf32, #tpu.memory_space<vmem>>, vector<1x128x64xf32>
    %1 = vector.shape_cast %0 : vector<1x128x64xf32> to vector<128x64xf32>
    %cst = arith.constant dense<0.000000e+00> : vector<64xf32>
    %2 = vector.multi_reduction <add>, %1, %cst [0] : vector<128x64xf32> to vector<64xf32>
    %3 = vector.shape_cast %2 : vector<64xf32> to vector<1x64xf32>
    %cst_2 = arith.constant 1.280000e+02 : f32
    %4 = vector.broadcast %cst_2 : f32 to vector<1x64xf32>
    %5 = arith.divf %3, %4 : vector<1x64xf32>
    %6 = vector.broadcast %5 : vector<1x64xf32> to vector<128x64xf32>
    %7 = arith.subf %1, %6 : vector<128x64xf32>
    %8 = arith.mulf %7, %7 : vector<128x64xf32>
    %cst_3 = arith.constant dense<0.000000e+00> : vector<64xf32>
    %9 = vector.multi_reduction <add>, %8, %cst_3 [0] : vector<128x64xf32> to vector<64xf32>
    %10 = vector.shape_cast %9 : vector<64xf32> to vector<1x64xf32>
    %cst_4 = arith.constant 9.99999993E-9 : f32
    %11 = vector.broadcast %cst_4 : f32 to vector<1x64xf32>
    %12 = arith.addf %10, %11 : vector<1x64xf32>
    %13 = math.rsqrt %12 : vector<1x64xf32>
    %14 = vector.broadcast %13 : vector<1x64xf32> to vector<128x64xf32>
    %15 = arith.mulf %7, %14 : vector<128x64xf32>
    %c0_5 = arith.constant 0 : index
    %c0_6 = arith.constant 0 : index
    %16 = vector.load %arg4[%c0_5, %c0_6] : memref<32x128xf32, #tpu.memory_space<vmem>>, vector<32x128xf32>
    %cst_7 = arith.constant dense<0.000000e+00> : vector<32x64xf32>
    %17 = tpu.matmul %16, %15, %cst_7 {dimension_numbers = #tpu.dot_dimension_numbers<[1], [0], [0], [1], [0, 0, 1, 1], [], []>} : vector<32x128xf32>, vector<128x64xf32>, vector<32x64xf32> -> vector<32x64xf32>
    %c0_8 = arith.constant 0 : index
    %c0_9 = arith.constant 0 : index
    %18 = vector.load %arg3[%c0_8, %c0_9] : memref<32x64xf32, #tpu.memory_space<vmem>>, vector<32x64xf32>
    %19 = arith.addf %17, %18 : vector<32x64xf32>
    %c0_10 = arith.constant 0 : index
    %c0_11 = arith.constant 0 : index
    %20 = vector.load %arg5[%c0_10, %c0_11] : memref<8x32xf32, #tpu.memory_space<vmem>>, vector<8x32xf32>
    %cst_12 = arith.constant dense<0.000000e+00> : vector<8x64xf32>
    %21 = tpu.matmul %20, %19, %cst_12 {dimension_numbers = #tpu.dot_dimension_numbers<[1], [0], [0], [1], [0, 0, 1, 1], [], []>} : vector<8x32xf32>, vector<32x64xf32>, vector<8x64xf32> -> vector<8x64xf32>
    %cst_13 = arith.constant dense<0xFF800000> : vector<64xf32>
    %22 = vector.multi_reduction <maximumf>, %21, %cst_13 [0] : vector<8x64xf32> to vector<64xf32>
    %23 = vector.shape_cast %22 : vector<64xf32> to vector<1x64xf32>
    %24 = vector.broadcast %23 : vector<1x64xf32> to vector<8x64xf32>
    %25 = arith.subf %21, %24 : vector<8x64xf32>
    %26 = math.exp %25 : vector<8x64xf32>
    %cst_14 = arith.constant dense<0.000000e+00> : vector<64xf32>
    %27 = vector.multi_reduction <add>, %26, %cst_14 [0] : vector<8x64xf32> to vector<64xf32>
    %28 = vector.shape_cast %27 : vector<64xf32> to vector<1x64xf32>
    %29 = tpu.reciprocal %28 {approx = true} : vector<1x64xf32> -> vector<1x64xf32>
    %30 = vector.broadcast %29 : vector<1x64xf32> to vector<8x64xf32>
    %31 = arith.mulf %26, %30 : vector<8x64xf32>
    %c0_15 = arith.constant 0 : index
    %c0_16 = arith.constant 0 : index
    %c0_17 = arith.constant 0 : index
    %32 = vector.load %arg6[%c0_15, %c0_16, %c0_17] : memref<1x32x8xf32, #tpu.memory_space<vmem>>, vector<1x32x8xf32>
    %33 = vector.shape_cast %32 : vector<1x32x8xf32> to vector<32x8xf32>
    %cst_18 = arith.constant dense<0.000000e+00> : vector<32x64xf32>
    %34 = tpu.matmul %33, %31, %cst_18 {dimension_numbers = #tpu.dot_dimension_numbers<[1], [0], [0], [1], [0, 0, 1, 1], [], []>} : vector<32x8xf32>, vector<8x64xf32>, vector<32x64xf32> -> vector<32x64xf32>
    %c0_19 = arith.constant 0 : index
    %c0_20 = arith.constant 0 : index
    %35 = vector.load %arg7[%c0_19, %c0_20] : memref<128x32xf32, #tpu.memory_space<vmem>>, vector<128x32xf32>
    %cst_21 = arith.constant dense<0.000000e+00> : vector<128x64xf32>
    %36 = tpu.matmul %35, %34, %cst_21 {dimension_numbers = #tpu.dot_dimension_numbers<[1], [0], [0], [1], [0, 0, 1, 1], [], []>} : vector<128x32xf32>, vector<32x64xf32>, vector<128x64xf32> -> vector<128x64xf32>
    %37 = arith.mulf %15, %36 : vector<128x64xf32>
    %c0_22 = arith.constant 0 : index
    %c0_23 = arith.constant 0 : index
    %c0_24 = arith.constant 0 : index
    %38 = vector.load %arg8[%c0_22, %c0_23, %c0_24] : memref<1x128x64xf32, #tpu.memory_space<vmem>>, vector<1x128x64xf32>
    %39 = vector.shape_cast %38 : vector<1x128x64xf32> to vector<128x64xf32>
    %40 = vector.shape_cast %37 : vector<128x64xf32> to vector<1x128x64xf32>
    tpu.vector_store %arg8[%c0_22, %c0_23, %c0_24], %40 {strides = array<i32>} : memref<1x128x64xf32, #tpu.memory_space<vmem>>, vector<1x128x64xf32>,
    %c0_25 = arith.constant 0 : index
    %c0_26 = arith.constant 0 : index
    %c0_27 = arith.constant 0 : index
    %41 = vector.load %arg9[%c0_25, %c0_26, %c0_27] : memref<1x32x64xf32, #tpu.memory_space<vmem>>, vector<1x32x64xf32>
    %42 = vector.shape_cast %41 : vector<1x32x64xf32> to vector<32x64xf32>
    %43 = vector.shape_cast %34 : vector<32x64xf32> to vector<1x32x64xf32>
    tpu.vector_store %arg9[%c0_25, %c0_26, %c0_27], %43 {strides = array<i32>} : memref<1x32x64xf32, #tpu.memory_space<vmem>>, vector<1x32x64xf32>,
    return
  }
  func.func @transform_0(%arg0: i32, %arg1: i32) -> (i32, i32, i32) {
    %c0_i32 = arith.constant 0 : i32
    %c0_i32_0 = arith.constant 0 : i32
    return %arg0, %c0_i32, %arg1 : i32, i32, i32
  }
  func.func @transform_1(%arg0: i32, %arg1: i32) -> (i32, i32) {
    %c0_i32 = arith.constant 0 : i32
    %c0_i32_0 = arith.constant 0 : i32
    return %c0_i32, %arg1 : i32, i32
  }
  func.func @transform_2(%arg0: i32, %arg1: i32) -> (i32, i32) {
    %c0_i32 = arith.constant 0 : i32
    %c0_i32_0 = arith.constant 0 : i32
    %c0_i32_1 = arith.constant 0 : i32
    return %c0_i32, %c0_i32_0 : i32, i32
  }
  func.func @transform_3(%arg0: i32, %arg1: i32) -> (i32, i32) {
    %c0_i32 = arith.constant 0 : i32
    %c0_i32_0 = arith.constant 0 : i32
    %c0_i32_1 = arith.constant 0 : i32
    return %c0_i32, %c0_i32_0 : i32, i32
  }
  func.func @transform_4(%arg0: i32, %arg1: i32) -> (i32, i32, i32) {
    %c0_i32 = arith.constant 0 : i32
    %c0_i32_0 = arith.constant 0 : i32
    %c0_i32_1 = arith.constant 0 : i32
    return %arg0, %c0_i32, %c0_i32_0 : i32, i32, i32
  }
  func.func @transform_5(%arg0: i32, %arg1: i32) -> (i32, i32) {
    %c0_i32 = arith.constant 0 : i32
    %c0_i32_0 = arith.constant 0 : i32
    %c0_i32_1 = arith.constant 0 : i32
    return %c0_i32, %c0_i32_0 : i32, i32
  }
  func.func @transform_6(%arg0: i32, %arg1: i32) -> (i32, i32, i32) {
    %c0_i32 = arith.constant 0 : i32
    %c0_i32_0 = arith.constant 0 : i32
    return %arg0, %c0_i32, %arg1 : i32, i32, i32
  }
  func.func @transform_7(%arg0: i32, %arg1: i32) -> (i32, i32, i32) {
    %c0_i32 = arith.constant 0 : i32
    %c0_i32_0 = arith.constant 0 : i32
    return %arg0, %c0_i32, %arg1 : i32, i32, i32
  }
}

</mosaic_0001>

<llo_original>
// kernel: tpu_custom_call.1
$region0: #{tpu_custom_call.1}
  #allocation0 [shape = 'u32[]', space=smem, size = 0x4, offset = 0x4, fixed_abs, tag = 'smem constant byte address 0x4 - core index']
  #allocation1 [shape = 'u32[144,128]{1,0:T(1,128)}', space=vmem, size = 0x12000, scoped, tag = 'internal scratch']
  %s0 = inlined_call_operand.vmem [shape: f32[2,128,64], index: 0, kind: input, shape index: {}]
  %s1 = inlined_call_operand.vmem [shape: f32[32,64], index: 1, kind: input, shape index: {}]
  %s2 = inlined_call_operand.vmem [shape: f32[32,128], index: 2, kind: input, shape index: {}]
  %s3 = inlined_call_operand.vmem [shape: f32[8,32], index: 3, kind: input, shape index: {}]
  %s4 = inlined_call_operand.vmem [shape: f32[2,32,8], index: 4, kind: input, shape index: {}]
  %s5 = inlined_call_operand.vmem [shape: f32[128,32], index: 5, kind: input, shape index: {}]
  %s6 = inlined_call_operand.vmem [shape: f32[2,128,64], index: 6, kind: output, shape index: {0}]
  %s7 = inlined_call_operand.hbm [shape: f32[2,32,64], index: 7, kind: output, shape index: {1}]
  %8 = xla_tuple %s6, %s7
  %s9 = sld [smem:[#allocation0]]
  $region65: #{tpu_custom_call.1} parent=0
    _
  %s11 = ssub.s32 1, %s9
  %s12 = scalar_select 0, %s11, %s9
  $region1: #{tpu_custom_call.1} parent=0
    #allocation2 [shape = 'u8[32768]{0}', space=vmem, size = 0x8000, scoped, tag = 'output window, operand 1']
    #allocation3 [shape = 's32[2]{0}', space=sflag, size = 0x8, scoped, tag = 'scoped memory for tpu_custom_call.1']
    %13 = vsyncpa [#allocation3], 0
    %s14 = scalar_lea.sflag [#allocation3], 1
    %15 = vsyncpa %s14, 0
    loop: start=0, step=1, limit=4
    $region2: #{tpu_custom_call.1} parent=1 // loop_pre_header
      _
    $region3: #{tpu_custom_call.1} parent=1 // loop_header
      %s17 = sphi 0, %s21
      %p18 = scmp.ge.s32.totalorder %s17, 4
      %s24 = sphi 0, %s36
      %s25 = sphi 0, %s32
      %s26 = sphi 0, %s24
      %s27 = sphi 0, %s25
      %s28 = sphi 0, %s26
      %s29 = sphi 0, %s27
      %s41 = sphi 0, %s43
      %s44 = sphi 0, %s41
      %s45 = sphi 0, %s44
      %s61 = sphi 0, %s45
      %s67 = sphi 0, %s69
      %s70 = sphi 0, %s67
      %s71 = sphi 0, %s70
      %s87 = sphi 0, %s71
      %s91 = sphi 0, %s91
      %s93 = sphi 0, %s91
      %s94 = sphi 0, %s93
      %s108 = sphi 0, %s94
      %s112 = sphi 0, %s112
      %s114 = sphi 0, %s112
      %s115 = sphi 0, %s114
      %s129 = sphi 0, %s115
      %s135 = sphi 0, %s137
      %s138 = sphi 0, %s135
      %s139 = sphi 0, %s138
      %s155 = sphi 0, %s139
      %s159 = sphi 0, %s159
      %s161 = sphi 0, %s159
      %s162 = sphi 0, %s161
      %s176 = sphi 0, %s162
      %s184 = sphi 0, %s186
      %s187 = sphi 0, %s184
      %s188 = sphi 0, %s187
      %s204 = sphi 0, %s188
      %s212 = sphi 0, %s214
      %s215 = sphi 0, %s212
      %s216 = sphi 0, %s215
      %s232 = sphi 0, %s216
    $region4: #{tpu_custom_call.1} parent=1 // loop_header_branch
      %20 = sbr.rel (%p18) target = $region8
    $region5: #{tpu_custom_call.1} parent=1 // loop_body
      %s22 = ssub.s32 %s17, 1
      %s23 = ssub.s32 %s17, 2
      %s30 = sadd.s32 1, %s25
      %p31 = scmp.ge.s32.totalorder %s30, 1
      %s32 = scalar_select %p31, 0, %s30
      %s33 = sadd.s32 1, %s24
      %s34 = scalar_select %p31, %s33, %s24
      %p35 = scmp.ge.s32.totalorder %s34, 2
      %s36 = scalar_select %p35, 0, %s34
      %s37 = ssub.s32 %s24, %s36
      %s38 = ssub.s32 %s25, %s32
      %s39 = sor.u32 %s37, %s38
      %p40 = scmp.eq.s32.totalorder %s39, 0
      %s42 = sadd.s32 %s41, 1
      %s43 = scalar_select %p40, %s41, %s42
      %p46 = pneg %p40
      %p47 = scmp.eq.s32.totalorder %s17, 1
      %p48 = por %p46, %p47
      %p49 = scmp.ne.s32.totalorder %s41, %s44
      %p50 = scmp.eq.s32.totalorder %s17, 0
      %p51 = por %p49, %p50
      %p52 = scmp.ne.s32.totalorder %s41, %s44
      %p53 = scmp.eq.s32.totalorder %s22, 1
      %p54 = por %p52, %p53
      %p55 = scmp.ne.s32.totalorder %s44, %s45
      %p56 = scmp.eq.s32.totalorder %s22, 0
      %p57 = por %p55, %p56
      %p58 = scmp.ne.s32.totalorder %s44, %s45
      %p59 = scmp.eq.s32.totalorder %s23, 1
      %p60 = por %p58, %p59
      %p62 = scmp.ne.s32.totalorder %s45, %s61
      %p63 = scmp.eq.s32.totalorder %s23, 0
      %p64 = por %p62, %p63
      %s65 = ssub.s32 %s25, %s32
      %p66 = scmp.eq.s32.totalorder %s65, 0
      %s68 = sadd.s32 %s67, 1
      %s69 = scalar_select %p66, %s67, %s68
      %p72 = pneg %p66
      %p73 = scmp.eq.s32.totalorder %s17, 1
      %p74 = por %p72, %p73
      %p75 = scmp.ne.s32.totalorder %s67, %s70
      %p76 = scmp.eq.s32.totalorder %s17, 0
      %p77 = por %p75, %p76
      %p78 = scmp.ne.s32.totalorder %s67, %s70
      %p79 = scmp.eq.s32.totalorder %s22, 1
      %p80 = por %p78, %p79
      %p81 = scmp.ne.s32.totalorder %s70, %s71
      %p82 = scmp.eq.s32.totalorder %s22, 0
      %p83 = por %p81, %p82
      %p84 = scmp.ne.s32.totalorder %s70, %s71
      %p85 = scmp.eq.s32.totalorder %s23, 1
      %p86 = por %p84, %p85
      %p88 = scmp.ne.s32.totalorder %s71, %s87
      %p89 = scmp.eq.s32.totalorder %s23, 0
      %p90 = por %p88, %p89
      %s92 = sadd.s32 %s91, 1
      %p95 = scmp.eq.s32.totalorder %s17, 1
      %p96 = scmp.ne.s32.totalorder %s91, %s93
      %p97 = scmp.eq.s32.totalorder %s17, 0
      %p98 = por %p96, %p97
      %p99 = scmp.ne.s32.totalorder %s91, %s93
      %p100 = scmp.eq.s32.totalorder %s22, 1
      %p101 = por %p99, %p100
      %p102 = scmp.ne.s32.totalorder %s93, %s94
      %p103 = scmp.eq.s32.totalorder %s22, 0
      %p104 = por %p102, %p103
      %p105 = scmp.ne.s32.totalorder %s93, %s94
      %p106 = scmp.eq.s32.totalorder %s23, 1
      %p107 = por %p105, %p106
      %p109 = scmp.ne.s32.totalorder %s94, %s108
      %p110 = scmp.eq.s32.totalorder %s23, 0
      %p111 = por %p109, %p110
      %s113 = sadd.s32 %s112, 1
      %p116 = scmp.eq.s32.totalorder %s17, 1
      %p117 = scmp.ne.s32.totalorder %s112, %s114
      %p118 = scmp.eq.s32.totalorder %s17, 0
      %p119 = por %p117, %p118
      %p120 = scmp.ne.s32.totalorder %s112, %s114
      %p121 = scmp.eq.s32.totalorder %s22, 1
      %p122 = por %p120, %p121
      %p123 = scmp.ne.s32.totalorder %s114, %s115
      %p124 = scmp.eq.s32.totalorder %s22, 0
      %p125 = por %p123, %p124
      %p126 = scmp.ne.s32.totalorder %s114, %s115
      %p127 = scmp.eq.s32.totalorder %s23, 1
      %p128 = por %p126, %p127
      %p130 = scmp.ne.s32.totalorder %s115, %s129
      %p131 = scmp.eq.s32.totalorder %s23, 0
      %p132 = por %p130, %p131
      %s133 = ssub.s32 %s24, %s36
      %p134 = scmp.eq.s32.totalorder %s133, 0
      %s136 = sadd.s32 %s135, 1
      %s137 = scalar_select %p134, %s135, %s136
      %p140 = pneg %p134
      %p141 = scmp.eq.s32.totalorder %s17, 1
      %p142 = por %p140, %p141
      %p143 = scmp.ne.s32.totalorder %s135, %s138
      %p144 = scmp.eq.s32.totalorder %s17, 0
      %p145 = por %p143, %p144
      %p146 = scmp.ne.s32.totalorder %s135, %s138
      %p147 = scmp.eq.s32.totalorder %s22, 1
      %p148 = por %p146, %p147
      %p149 = scmp.ne.s32.totalorder %s138, %s139
      %p150 = scmp.eq.s32.totalorder %s22, 0
      %p151 = por %p149, %p150
      %p152 = scmp.ne.s32.totalorder %s138, %s139
      %p153 = scmp.eq.s32.totalorder %s23, 1
      %p154 = por %p152, %p153
      %p156 = scmp.ne.s32.totalorder %s139, %s155
      %p157 = scmp.eq.s32.totalorder %s23, 0
      %p158 = por %p156, %p157
      %s160 = sadd.s32 %s159, 1
      %p163 = scmp.eq.s32.totalorder %s17, 1
      %p164 = scmp.ne.s32.totalorder %s159, %s161
      %p165 = scmp.eq.s32.totalorder %s17, 0
      %p166 = por %p164, %p165
      %p167 = scmp.ne.s32.totalorder %s159, %s161
      %p168 = scmp.eq.s32.totalorder %s22, 1
      %p169 = por %p167, %p168
      %p170 = scmp.ne.s32.totalorder %s161, %s162
      %p171 = scmp.eq.s32.totalorder %s22, 0
      %p172 = por %p170, %p171
      %p173 = scmp.ne.s32.totalorder %s161, %s162
      %p174 = scmp.eq.s32.totalorder %s23, 1
      %p175 = por %p173, %p174
      %p177 = scmp.ne.s32.totalorder %s162, %s176
      %p178 = scmp.eq.s32.totalorder %s23, 0
      %p179 = por %p177, %p178
      %s180 = ssub.s32 %s24, %s36
      %s181 = ssub.s32 %s25, %s32
      %s182 = sor.u32 %s180, %s181
      %p183 = scmp.eq.s32.totalorder %s182, 0
      %s185 = sadd.s32 %s184, 1
      %s186 = scalar_select %p183, %s184, %s185
      %p189 = pneg %p183
      %p190 = scmp.eq.s32.totalorder %s17, 1
      %p191 = por %p189, %p190
      %p192 = scmp.ne.s32.totalorder %s184, %s187
      %p193 = scmp.eq.s32.totalorder %s17, 0
      %p194 = por %p192, %p193
      %p195 = scmp.ne.s32.totalorder %s184, %s187
      %p196 = scmp.eq.s32.totalorder %s22, 1
      %p197 = por %p195, %p196
      %p198 = scmp.ne.s32.totalorder %s187, %s188
      %p199 = scmp.eq.s32.totalorder %s22, 0
      %p200 = por %p198, %p199
      %p201 = scmp.ne.s32.totalorder %s187, %s188
      %p202 = scmp.eq.s32.totalorder %s23, 1
      %p203 = por %p201, %p202
      %p205 = scmp.ne.s32.totalorder %s188, %s204
      %p206 = scmp.eq.s32.totalorder %s23, 0
      %p207 = por %p205, %p206
      %s208 = ssub.s32 %s24, %s36
      %s209 = ssub.s32 %s25, %s32
      %s210 = sor.u32 %s208, %s209
      %p211 = scmp.eq.s32.totalorder %s210, 0
      %s213 = sadd.s32 %s212, 1
      %s214 = scalar_select %p211, %s212, %s213
      %p217 = pneg %p211
      %p218 = scmp.eq.s32.totalorder %s17, 1
      %p219 = por %p217, %p218
      %p220 = scmp.ne.s32.totalorder %s212, %s215
      %p221 = scmp.eq.s32.totalorder %s17, 0
      %p222 = por %p220, %p221
      %p223 = scmp.ne.s32.totalorder %s212, %s215
      %p224 = scmp.eq.s32.totalorder %s22, 1
      %p225 = por %p223, %p224
      %p226 = scmp.ne.s32.totalorder %s215, %s216
      %p227 = scmp.eq.s32.totalorder %s22, 0
      %p228 = por %p226, %p227
      %p229 = scmp.ne.s32.totalorder %s215, %s216
      %p230 = scmp.eq.s32.totalorder %s23, 1
      %p231 = por %p229, %p230
      %p233 = scmp.ne.s32.totalorder %s216, %s232
      %p234 = scmp.eq.s32.totalorder %s23, 0
      %p235 = por %p233, %p234
      %p236 = scmp.le.s32.totalorder 1, %s17
      %p237 = scmp.lt.s32.totalorder %s17, 3
      %p238 = pnand %p236, %p237
      %p239 = pneg %p238
      // Predicated region
      $region9: #{tpu_custom_call.1} parent=5 // pred_check
        _
      $region10: #{tpu_custom_call.1} parent=5 // pred_check_branch
        %241 = sbr.rel (%p238) target = $region12
      $region11: #{tpu_custom_call.1} parent=5 // pred_region
        %s242 = ssub.s32 %s17, 1
        // Predicated region
        $region13: #{tpu_custom_call.1} parent=11 // pred_check
          %p243 = pneg %p83
        $region14: #{tpu_custom_call.1} parent=11 // pred_check_branch
          %245 = sbr.rel (%p243) target = $region16
        $region15: #{tpu_custom_call.1} parent=11 // pred_region
          %p246 = scmp.lt.s32.totalorder %s27, 0
          %s247 = scalar_select %p246, %s27, 0
          %s248 = smul.addr %s247, 8
          %s249 = scalar_lea.vmem %s1, %s248
        $region16: #{tpu_custom_call.1} parent=11 // pred_fallthru
          _
        // Predicated region
        $region17: #{tpu_custom_call.1} parent=11 // pred_check
          %p250 = pneg %p104
        $region18: #{tpu_custom_call.1} parent=11 // pred_check_branch
          %252 = sbr.rel (%p250) target = $region20
        $region19: #{tpu_custom_call.1} parent=11 // pred_region
          _
        $region20: #{tpu_custom_call.1} parent=11 // pred_fallthru
          _
        // Predicated region
        $region21: #{tpu_custom_call.1} parent=11 // pred_check
          %p253 = pneg %p125
        $region22: #{tpu_custom_call.1} parent=11 // pred_check_branch
          %255 = sbr.rel (%p253) target = $region24
        $region23: #{tpu_custom_call.1} parent=11 // pred_region
          _
        $region24: #{tpu_custom_call.1} parent=11 // pred_fallthru
          _
        // Predicated region
        $region25: #{tpu_custom_call.1} parent=11 // pred_check
          %p256 = pneg %p172
        $region26: #{tpu_custom_call.1} parent=11 // pred_check_branch
          %258 = sbr.rel (%p256) target = $region28
        $region27: #{tpu_custom_call.1} parent=11 // pred_region
          _
        $region28: #{tpu_custom_call.1} parent=11 // pred_fallthru
          _
      $region12: #{tpu_custom_call.1} parent=5 // pred_fallthru
        _
      %p259 = scmp.lt.s32.totalorder %s17, 2
      // Predicated region
      $region29: #{tpu_custom_call.1} parent=5 // pred_check
        %p260 = pneg %p259
      $region30: #{tpu_custom_call.1} parent=5 // pred_check_branch
        %262 = sbr.rel (%p260) target = $region32
      $region31: #{tpu_custom_call.1} parent=5 // pred_region
        // Predicated region
        $region33: #{tpu_custom_call.1} parent=31 // pred_check
          %p263 = pneg %p51
        $region34: #{tpu_custom_call.1} parent=31 // pred_check_branch
          %265 = sbr.rel (%p263) target = $region36
        $region35: #{tpu_custom_call.1} parent=31 // pred_region
          %p266 = scmp.lt.s32.totalorder %s24, 1
          %s267 = scalar_select %p266, %s24, 1
          %p268 = scmp.lt.s32.totalorder %s25, 0
          %s269 = scalar_select %p268, %s25, 0
          %s270 = smul.addr %s267, 16
          %s271 = sadd.s32 %s269, %s270
          %s272 = smul.addr %s271, 8
          %s273 = scalar_lea.vmem %s0, %s272
        $region36: #{tpu_custom_call.1} parent=31 // pred_fallthru
          _
        // Predicated region
        $region37: #{tpu_custom_call.1} parent=31 // pred_check
          %p274 = pneg %p145
        $region38: #{tpu_custom_call.1} parent=31 // pred_check_branch
          %276 = sbr.rel (%p274) target = $region40
        $region39: #{tpu_custom_call.1} parent=31 // pred_region
          %p277 = scmp.lt.s32.totalorder %s24, 1
          %s278 = scalar_select %p277, %s24, 1
          %s279 = smul.addr %s278, 4
          %s280 = smul.addr %s279, 8
          %s281 = scalar_lea.vmem %s4, %s280
        $region40: #{tpu_custom_call.1} parent=31 // pred_fallthru
          _
      $region32: #{tpu_custom_call.1} parent=5 // pred_fallthru
        _
      %p282 = scmp.le.s32.totalorder 1, %s17
      %p283 = scmp.lt.s32.totalorder %s17, 3
      %p284 = pnand %p282, %p283
      %p285 = pneg %p284
      // Predicated region
      $region41: #{tpu_custom_call.1} parent=5 // pred_check
        _
      $region42: #{tpu_custom_call.1} parent=5 // pred_check_branch
        %287 = sbr.rel (%p284) target = $region44
      $region43: #{tpu_custom_call.1} parent=5 // pred_region
        %s288 = ssub.s32 %s17, 1
        %p289 = scmp.lt.s32.totalorder %s26, 1
        %s290 = scalar_select %p289, %s26, 1
        %p291 = scmp.lt.s32.totalorder %s27, 0
        %s292 = scalar_select %p291, %s27, 0
        %s293 = smul.addr %s290, 16
        %s294 = sadd.s32 %s292, %s293
        %s295 = smul.addr %s294, 8
        %s296 = scalar_lea.vmem %s0, %s295
        %p297 = pneg %p57
        %p298 = pneg %p54
        %p299 = scmp.lt.s32.totalorder %s27, 0
        %s300 = scalar_select %p299, %s27, 0
        %s301 = smul.addr %s300, 8
        %s302 = scalar_lea.vmem %s1, %s301
        %p303 = pneg %p83
        %p304 = pneg %p80
        %p305 = pneg %p104
        %p306 = pneg %p101
        %p307 = pneg %p125
        %p308 = pneg %p122
        %p309 = scmp.lt.s32.totalorder %s26, 1
        %s310 = scalar_select %p309, %s26, 1
        %s311 = smul.addr %s310, 4
        %s312 = smul.addr %s311, 8
        %s313 = scalar_lea.vmem %s4, %s312
        %p314 = pneg %p151
        %p315 = pneg %p148
        %p316 = pneg %p172
        %p317 = pneg %p169
        %p318 = pneg %p200
        %p319 = pneg %p197
        %p320 = scmp.lt.s32.totalorder %s26, 1
        %s321 = scalar_select %p320, %s26, 1
        %p322 = scmp.lt.s32.totalorder %s27, 0
        %s323 = scalar_select %p322, %s27, 0
        %s324 = smul.addr %s321, 16
        %s325 = sadd.s32 %s323, %s324
        %s326 = smul.addr %s325, 8
        %s327 = scalar_lea.vmem %s6, %s326
        %p328 = pneg %p228
        %p329 = pneg %p225
        %s330 = sand.u32 %s215, 1
        %s331 = scalar_lea.sflag [#allocation3], %s330
        %s332 = sand.u32 %s215, 1
        %s333 = smul.addr %s332, 32
        %s334 = scalar_lea.vmem [#allocation2], %s333
        %p335 = scmp.lt.s32.totalorder %s26, 1
        %s336 = scalar_select %p335, %s26, 1
        %p337 = scmp.lt.s32.totalorder %s27, 0
        %s338 = scalar_select %p337, %s27, 0
        %s339 = smul.addr %s336, 16
        %s340 = sadd.s32 %s338, %s339
        %s341 = smul.addr %s340, 8
        %s342 = scalar_lea.vmem %s0, %s341
        %p343 = scmp.lt.s32.totalorder %s27, 0
        %s344 = scalar_select %p343, %s27, 0
        %s345 = smul.addr %s344, 8
        %s346 = scalar_lea.vmem %s1, %s345
        %p347 = scmp.lt.s32.totalorder %s26, 1
        %s348 = scalar_select %p347, %s26, 1
        %s349 = smul.addr %s348, 4
        %s350 = smul.addr %s349, 8
        %s351 = scalar_lea.vmem %s4, %s350
        %p352 = scmp.lt.s32.totalorder %s26, 1
        %s353 = scalar_select %p352, %s26, 1
        %p354 = scmp.lt.s32.totalorder %s27, 0
        %s355 = scalar_select %p354, %s27, 0
        %s356 = smul.addr %s353, 16
        %s357 = sadd.s32 %s355, %s356
        %s358 = smul.addr %s357, 8
        %s359 = scalar_lea.vmem %s6, %s358
        %v360 = vld [vmem:[%s342] sm:$0xff]
        %v361 = vld [vmem:[%s342 + $0x8] sm:$0xff]
        %v362 = vld [vmem:[%s342 + $0x10] sm:$0xff]
        %v363 = vld [vmem:[%s342 + $0x18] sm:$0xff]
        %v364 = vld [vmem:[%s342 + $0x20] sm:$0xff]
        %v365 = vld [vmem:[%s342 + $0x28] sm:$0xff]
        %v366 = vld [vmem:[%s342 + $0x30] sm:$0xff]
        %v367 = vld [vmem:[%s342 + $0x38] sm:$0xff]
        %v368 = vld [vmem:[%s342 + $0x40] sm:$0xff]
        %v369 = vld [vmem:[%s342 + $0x48] sm:$0xff]
        %v370 = vld [vmem:[%s342 + $0x50] sm:$0xff]
        %v371 = vld [vmem:[%s342 + $0x58] sm:$0xff]
        %v372 = vld [vmem:[%s342 + $0x60] sm:$0xff]
        %v373 = vld [vmem:[%s342 + $0x68] sm:$0xff]
        %v374 = vld [vmem:[%s342 + $0x70] sm:$0xff]
        %v375 = vld [vmem:[%s342 + $0x78] sm:$0xff]
        %vm376 = vcmask 523264
        %v377 = vsel %vm376, %v360, 0.0
        %v378 = vsel %vm376, %v361, 0.0
        %v379 = vadd.f32 %v377, %v378
        %v380 = vsel %vm376, %v362, 0.0
        %v381 = vadd.f32 %v379, %v380
        %v382 = vsel %vm376, %v363, 0.0
        %v383 = vadd.f32 %v381, %v382
        %v384 = vsel %vm376, %v364, 0.0
        %v385 = vadd.f32 %v383, %v384
        %v386 = vsel %vm376, %v365, 0.0
        %v387 = vadd.f32 %v385, %v386
        %v388 = vsel %vm376, %v366, 0.0
        %v389 = vadd.f32 %v387, %v388
        %v390 = vsel %vm376, %v367, 0.0
        %v391 = vadd.f32 %v389, %v390
        %v392 = vsel %vm376, %v368, 0.0
        %v393 = vadd.f32 %v391, %v392
        %v394 = vsel %vm376, %v369, 0.0
        %v395 = vadd.f32 %v393, %v394
        %v396 = vsel %vm376, %v370, 0.0
        %v397 = vadd.f32 %v395, %v396
        %v398 = vsel %vm376, %v371, 0.0
        %v399 = vadd.f32 %v397, %v398
        %v400 = vsel %vm376, %v372, 0.0
        %v401 = vadd.f32 %v399, %v400
        %v402 = vsel %vm376, %v373, 0.0
        %v403 = vadd.f32 %v401, %v402
        %v404 = vsel %vm376, %v374, 0.0
        %v405 = vadd.f32 %v403, %v404
        %v406 = vsel %vm376, %v375, 0.0
        %v407 = vadd.f32 %v405, %v406
        %v408 = vrot.slane %v407, 4
        %v409 = vadd.f32 %v407, %v408
        %v410 = vrot.slane %v409, 2
        %v411 = vadd.f32 %v409, %v410
        %v412 = vrot.slane %v411, 1
        %v413 = vadd.f32 %v411, %v412
        %v414 = vrcp.pop 128.0
        %v415 = vmul.f32 %v413, %v414
        %v416 = vsub.f32 %v360, %v415
        %v417 = vsub.f32 %v361, %v415
        %v418 = vsub.f32 %v362, %v415
        %v419 = vsub.f32 %v363, %v415
        %v420 = vsub.f32 %v364, %v415
        %v421 = vsub.f32 %v365, %v415
        %v422 = vsub.f32 %v366, %v415
        %v423 = vsub.f32 %v367, %v415
        %v424 = vsub.f32 %v368, %v415
        %v425 = vsub.f32 %v369, %v415
        %v426 = vsub.f32 %v370, %v415
        %v427 = vsub.f32 %v371, %v415
        %v428 = vsub.f32 %v372, %v415
        %v429 = vsub.f32 %v373, %v415
        %v430 = vsub.f32 %v374, %v415
        %v431 = vsub.f32 %v375, %v415
        %v432 = vmul.f32 %v416, %v416
        %v433 = vmul.f32 %v417, %v417
        %v434 = vmul.f32 %v418, %v418
        %v435 = vmul.f32 %v419, %v419
        %v436 = vmul.f32 %v420, %v420
        %v437 = vmul.f32 %v421, %v421
        %v438 = vmul.f32 %v422, %v422
        %v439 = vmul.f32 %v423, %v423
        %v440 = vmul.f32 %v424, %v424
        %v441 = vmul.f32 %v425, %v425
        %v442 = vmul.f32 %v426, %v426
        %v443 = vmul.f32 %v427, %v427
        %v444 = vmul.f32 %v428, %v428
        %v445 = vmul.f32 %v429, %v429
        %v446 = vmul.f32 %v430, %v430
        %v447 = vmul.f32 %v431, %v431
        %v448 = vsel %vm376, %v432, 0.0
        %v449 = vsel %vm376, %v433, 0.0
        %v450 = vadd.f32 %v448, %v449
        %v451 = vsel %vm376, %v434, 0.0
        %v452 = vadd.f32 %v450, %v451
        %v453 = vsel %vm376, %v435, 0.0
        %v454 = vadd.f32 %v452, %v453
        %v455 = vsel %vm376, %v436, 0.0
        %v456 = vadd.f32 %v454, %v455
        %v457 = vsel %vm376, %v437, 0.0
        %v458 = vadd.f32 %v456, %v457
        %v459 = vsel %vm376, %v438, 0.0
        %v460 = vadd.f32 %v458, %v459
        %v461 = vsel %vm376, %v439, 0.0
        %v462 = vadd.f32 %v460, %v461
        %v463 = vsel %vm376, %v440, 0.0
        %v464 = vadd.f32 %v462, %v463
        %v465 = vsel %vm376, %v441, 0.0
        %v466 = vadd.f32 %v464, %v465
        %v467 = vsel %vm376, %v442, 0.0
        %v468 = vadd.f32 %v466, %v467
        %v469 = vsel %vm376, %v443, 0.0
        %v470 = vadd.f32 %v468, %v469
        %v471 = vsel %vm376, %v444, 0.0
        %v472 = vadd.f32 %v470, %v471
        %v473 = vsel %vm376, %v445, 0.0
        %v474 = vadd.f32 %v472, %v473
        %v475 = vsel %vm376, %v446, 0.0
        %v476 = vadd.f32 %v474, %v475
        %v477 = vsel %vm376, %v447, 0.0
        %v478 = vadd.f32 %v476, %v477
        %v479 = vrot.slane %v478, 4
        %v480 = vadd.f32 %v478, %v479
        %v481 = vrot.slane %v480, 2
        %v482 = vadd.f32 %v480, %v481
        %v483 = vrot.slane %v482, 1
        %v484 = vadd.f32 %v482, %v483
        %v485 = vadd.f32 %v484, 1e-08
        %v486 = vrsqrt.pop %v485
        %v487 = vmul.f32 %v416, %v486
        %v488 = vmul.f32 %v417, %v486
        %v489 = vmul.f32 %v418, %v486
        %v490 = vmul.f32 %v419, %v486
        %v491 = vmul.f32 %v420, %v486
        %v492 = vmul.f32 %v421, %v486
        %v493 = vmul.f32 %v422, %v486
        %v494 = vmul.f32 %v423, %v486
        %v495 = vmul.f32 %v424, %v486
        %v496 = vmul.f32 %v425, %v486
        %v497 = vmul.f32 %v426, %v486
        %v498 = vmul.f32 %v427, %v486
        %v499 = vmul.f32 %v428, %v486
        %v500 = vmul.f32 %v429, %v486
        %v501 = vmul.f32 %v430, %v486
        %v502 = vmul.f32 %v431, %v486
        %v503 = vld [vmem:[%s2] sm:$0xff]
        %v504 = vld [vmem:[%s2 + $0x8] sm:$0xff]
        %v505 = vld [vmem:[%s2 + $0x10] sm:$0xff]
        %v506 = vld [vmem:[%s2 + $0x18] sm:$0xff]
        %v507 = vld [vmem:[%s346] sm:$0xff]
        %v508 = vld [vmem:[%s346 + $0x8] sm:$0xff]
        %v509 = vld [vmem:[%s346 + $0x10] sm:$0xff]
        %v510 = vld [vmem:[%s346 + $0x18] sm:$0xff]
        %511 = vmatprep.subr.mxu0 0.0
        %512 = vmatpush1.msra.mxu0 %v487
        %513 = vmatprep.subr.mxu0 0.0
        %514 = vmatpush1.msra.mxu0 %v488
        %515 = vmatprep.subr.mxu0 0.0
        %516 = vmatpush1.msra.mxu0 %v489
        %517 = vmatprep.subr.mxu0 0.0
        %518 = vmatpush1.msra.mxu0 %v490
        %519 = vmatprep.subr.mxu0 0.0
        %520 = vmatpush1.msra.mxu0 %v491
        %521 = vmatprep.subr.mxu0 0.0
        %522 = vmatpush1.msra.mxu0 %v492
        %523 = vmatprep.subr.mxu0 0.0
        %524 = vmatpush1.msra.mxu0 %v493
        %525 = vmatprep.subr.mxu0 0.0
        %526 = vmatpush1.msra.mxu0 %v494
        %527 = vmatprep.subr.mxu0 0.0
        %528 = vmatpush1.msra.mxu0 %v495
        %529 = vmatprep.subr.mxu0 0.0
        %530 = vmatpush1.msra.mxu0 %v496
        %531 = vmatprep.subr.mxu0 0.0
        %532 = vmatpush1.msra.mxu0 %v497
        %533 = vmatprep.subr.mxu0 0.0
        %534 = vmatpush1.msra.mxu0 %v498
        %535 = vmatprep.subr.mxu0 0.0
        %536 = vmatpush1.msra.mxu0 %v499
        %537 = vmatprep.subr.mxu0 0.0
        %538 = vmatpush1.msra.mxu0 %v500
        %539 = vmatprep.subr.mxu0 0.0
        %540 = vmatpush1.msra.mxu0 %v501
        %541 = vmatprep.subr.mxu0 0.0
        %542 = vmatpush1.msra.mxu0 %v502
        %543 = vmatprep.subr.mxu0 0.0
        %544 = vmatpush1.msra.mxu0 0.0
        %545 = vmatprep.subr.mxu0 0.0
        %546 = vmatpush1.msra.mxu0 0.0
        %547 = vmatprep.subr.mxu0 0.0
        %548 = vmatpush1.msra.mxu0 0.0
        %549 = vmatprep.subr.mxu0 0.0
        %550 = vmatpush1.msra.mxu0 0.0
        %551 = vmatprep.subr.mxu0 0.0
        %552 = vmatpush1.msra.mxu0 0.0
        %553 = vmatprep.subr.mxu0 0.0
        %554 = vmatpush1.msra.mxu0 0.0
        %555 = vmatprep.subr.mxu0 0.0
        %556 = vmatpush1.msra.mxu0 0.0
        %557 = vmatprep.subr.mxu0 0.0
        %558 = vmatpush1.msra.mxu0 0.0
        %559 = vmatprep.subr.mxu0 0.0
        %560 = vmatpush1.msra.mxu0 0.0
        %561 = vmatprep.subr.mxu0 0.0
        %562 = vmatpush1.msra.mxu0 0.0
        %563 = vmatprep.subr.mxu0 0.0
        %564 = vmatpush1.msra.mxu0 0.0
        %565 = vmatprep.subr.mxu0 0.0
        %566 = vmatpush1.msra.mxu0 0.0
        %567 = vmatprep.subr.mxu0 0.0
        %568 = vmatpush1.msra.mxu0 0.0
        %569 = vmatprep.subr.mxu0 0.0
        %570 = vmatpush1.msra.mxu0 0.0
        %571 = vmatprep.subr.mxu0 0.0
        %572 = vmatpush1.msra.mxu0 0.0
        %573 = vmatprep.subr.mxu0 0.0
        %574 = vmatpush1.msra.mxu0 0.0
        %575 = vmatprep.mubr.f32.mxu0 0.0
        %576 = vmatmul.mubr.f32.gmra.mrb[0].mxu0 %v503
        %v577 = vpop.f32.mrb[0].mxu0
        %v578 = vadd.f32 %v507, %v577
        %v579 = vpop.f32.mrb[0].mxu0
        %580 = vmatprep.mubr.f32.mxu0 0.0
        %581 = vmatmul.mubr.f32.gmra.mrb[0].mxu0 %v504
        %v582 = vpop.f32.mrb[0].mxu0
        %v583 = vadd.f32 %v508, %v582
        %v584 = vpop.f32.mrb[0].mxu0
        %585 = vmatprep.mubr.f32.mxu0 0.0
        %586 = vmatmul.mubr.f32.gmra.mrb[0].mxu0 %v505
        %v587 = vpop.f32.mrb[0].mxu0
        %v588 = vadd.f32 %v509, %v587
        %v589 = vpop.f32.mrb[0].mxu0
        %590 = vmatprep.mubr.f32.mxu0 0.0
        %591 = vmatmul.mubr.f32.gmra.mrb[0].mxu0 %v506
        %v592 = vpop.f32.mrb[0].mxu0
        %v593 = vadd.f32 %v510, %v592
        %v594 = vpop.f32.mrb[0].mxu0
        %595 = vdwg.mxu0
        %v596 = vld [vmem:[%s3] sm:$0xff]
        %vm597 = vcmask 261120
        %v599 = vsel %vm597, %v596, 0
        %601 = vmatprep.subr.mxu0 0.0
        %602 = vmatpush1.msra.mxu0 %v578
        %603 = vmatprep.subr.mxu0 0.0
        %604 = vmatpush1.msra.mxu0 %v583
        %605 = vmatprep.subr.mxu0 0.0
        %606 = vmatpush1.msra.mxu0 %v588
        %607 = vmatprep.subr.mxu0 0.0
        %608 = vmatpush1.msra.mxu0 %v593
        %609 = vmatprep.subr.mxu0 0.0
        %610 = vmatpush1.msra.mxu0 0.0
        %611 = vmatprep.subr.mxu0 0.0
        %612 = vmatpush1.msra.mxu0 0.0
        %613 = vmatprep.subr.mxu0 0.0
        %614 = vmatpush1.msra.mxu0 0.0
        %615 = vmatprep.subr.mxu0 0.0
        %616 = vmatpush1.msra.mxu0 0.0
        %617 = vmatprep.subr.mxu0 0.0
        %618 = vmatpush1.msra.mxu0 0.0
        %619 = vmatprep.subr.mxu0 0.0
        %620 = vmatpush1.msra.mxu0 0.0
        %621 = vmatprep.subr.mxu0 0.0
        %622 = vmatpush1.msra.mxu0 0.0
        %623 = vmatprep.subr.mxu0 0.0
        %624 = vmatpush1.msra.mxu0 0.0
        %625 = vmatprep.subr.mxu0 0.0
        %626 = vmatpush1.msra.mxu0 0.0
        %627 = vmatprep.subr.mxu0 0.0
        %628 = vmatpush1.msra.mxu0 0.0
        %629 = vmatprep.subr.mxu0 0.0
        %630 = vmatpush1.msra.mxu0 0.0
        %631 = vmatprep.subr.mxu0 0.0
        %632 = vmatpush1.msra.mxu0 0.0
        %633 = vmatprep.subr.mxu0 0.0
        %634 = vmatpush1.msra.mxu0 0.0
        %635 = vmatprep.subr.mxu0 0.0
        %636 = vmatpush1.msra.mxu0 0.0
        %637 = vmatprep.subr.mxu0 0.0
        %638 = vmatpush1.msra.mxu0 0.0
        %639 = vmatprep.subr.mxu0 0.0
        %640 = vmatpush1.msra.mxu0 0.0
        %641 = vmatprep.subr.mxu0 0.0
        %642 = vmatpush1.msra.mxu0 0.0
        %643 = vmatprep.subr.mxu0 0.0
        %644 = vmatpush1.msra.mxu0 0.0
        %645 = vmatprep.subr.mxu0 0.0
        %646 = vmatpush1.msra.mxu0 0.0
        %647 = vmatprep.subr.mxu0 0.0
        %648 = vmatpush1.msra.mxu0 0.0
        %649 = vmatprep.subr.mxu0 0.0
        %650 = vmatpush1.msra.mxu0 0.0
        %651 = vmatprep.subr.mxu0 0.0
        %652 = vmatpush1.msra.mxu0 0.0
        %653 = vmatprep.subr.mxu0 0.0
        %654 = vmatpush1.msra.mxu0 0.0
        %655 = vmatprep.subr.mxu0 0.0
        %656 = vmatpush1.msra.mxu0 0.0
        %657 = vmatprep.subr.mxu0 0.0
        %658 = vmatpush1.msra.mxu0 0.0
        %659 = vmatprep.subr.mxu0 0.0
        %660 = vmatpush1.msra.mxu0 0.0
        %661 = vmatprep.subr.mxu0 0.0
        %662 = vmatpush1.msra.mxu0 0.0
        %663 = vmatprep.subr.mxu0 0.0
        %664 = vmatpush1.msra.mxu0 0.0
        %665 = vmatprep.mubr.f32.mxu0 0.0
        %666 = vmatmul.mubr.f32.gmra.mrb[0].mxu0 %v599
        %v667 = vpop.f32.mrb[0].mxu0
        %v668 = vadd.f32 0.0, %v667
        %v669 = vpop.f32.mrb[0].mxu0
        %670 = vdwg.mxu0
        %v671 = vsel %vm376, %v668, -inf
        %v672 = vrot.slane %v671, 4
        %v673 = vmax.f32 %v671, %v672
        %v674 = vrot.slane %v673, 2
        %v675 = vmax.f32 %v673, %v674
        %v676 = vrot.slane %v675, 1
        %v677 = vmax.f32 %v675, %v676
        %v678 = vsub.f32 %v668, %v677
        %v679 = vmul.f32 %v678, 1.442695
        %v680 = vpow.pop %v679
        %v681 = vsel %vm376, %v680, 0.0
        %v682 = vrot.slane %v681, 4
        %v683 = vadd.f32 %v681, %v682
        %v684 = vrot.slane %v683, 2
        %v685 = vadd.f32 %v683, %v684
        %v686 = vrot.slane %v685, 1
        %v687 = vadd.f32 %v685, %v686
        %v688 = vrcp.pop %v687
        %v689 = vmul.f32 %v680, %v688
        %v690 = vld [vmem:[%s351] sm:$0xff]
        %v691 = vld [vmem:[%s351 + $0x8] sm:$0xff]
        %v692 = vld [vmem:[%s351 + $0x10] sm:$0xff]
        %v693 = vld [vmem:[%s351 + $0x18] sm:$0xff]
        %vm694 = vcmask 64512
        %v696 = vsel %vm694, %v690, 0
        %v699 = vsel %vm694, %v691, 0
        %v702 = vsel %vm694, %v692, 0
        %v705 = vsel %vm694, %v693, 0
        %707 = vmatprep.subr.mxu0 0.0
        %708 = vmatpush1.msra.mxu0 %v689
        %709 = vmatprep.subr.mxu0 0.0
        %710 = vmatpush1.msra.mxu0 0.0
        %711 = vmatprep.subr.mxu0 0.0
        %712 = vmatpush1.msra.mxu0 0.0
        %713 = vmatprep.subr.mxu0 0.0
        %714 = vmatpush1.msra.mxu0 0.0
        %715 = vmatprep.subr.mxu0 0.0
        %716 = vmatpush1.msra.mxu0 0.0
        %717 = vmatprep.subr.mxu0 0.0
        %718 = vmatpush1.msra.mxu0 0.0
        %719 = vmatprep.subr.mxu0 0.0
        %720 = vmatpush1.msra.mxu0 0.0
        %721 = vmatprep.subr.mxu0 0.0
        %722 = vmatpush1.msra.mxu0 0.0
        %723 = vmatprep.subr.mxu0 0.0
        %724 = vmatpush1.msra.mxu0 0.0
        %725 = vmatprep.subr.mxu0 0.0
        %726 = vmatpush1.msra.mxu0 0.0
        %727 = vmatprep.subr.mxu0 0.0
        %728 = vmatpush1.msra.mxu0 0.0
        %729 = vmatprep.subr.mxu0 0.0
        %730 = vmatpush1.msra.mxu0 0.0
        %731 = vmatprep.subr.mxu0 0.0
        %732 = vmatpush1.msra.mxu0 0.0
        %733 = vmatprep.subr.mxu0 0.0
        %734 = vmatpush1.msra.mxu0 0.0
        %735 = vmatprep.subr.mxu0 0.0
        %736 = vmatpush1.msra.mxu0 0.0
        %737 = vmatprep.subr.mxu0 0.0
        %738 = vmatpush1.msra.mxu0 0.0
        %739 = vmatprep.subr.mxu0 0.0
        %740 = vmatpush1.msra.mxu0 0.0
        %741 = vmatprep.subr.mxu0 0.0
        %742 = vmatpush1.msra.mxu0 0.0
        %743 = vmatprep.subr.mxu0 0.0
        %744 = vmatpush1.msra.mxu0 0.0
        %745 = vmatprep.subr.mxu0 0.0
        %746 = vmatpush1.msra.mxu0 0.0
        %747 = vmatprep.subr.mxu0 0.0
        %748 = vmatpush1.msra.mxu0 0.0
        %749 = vmatprep.subr.mxu0 0.0
        %750 = vmatpush1.msra.mxu0 0.0
        %751 = vmatprep.subr.mxu0 0.0
        %752 = vmatpush1.msra.mxu0 0.0
        %753 = vmatprep.subr.mxu0 0.0
        %754 = vmatpush1.msra.mxu0 0.0
        %755 = vmatprep.subr.mxu0 0.0
        %756 = vmatpush1.msra.mxu0 0.0
        %757 = vmatprep.subr.mxu0 0.0
        %758 = vmatpush1.msra.mxu0 0.0
        %759 = vmatprep.subr.mxu0 0.0
        %760 = vmatpush1.msra.mxu0 0.0
        %761 = vmatprep.subr.mxu0 0.0
        %762 = vmatpush1.msra.mxu0 0.0
        %763 = vmatprep.subr.mxu0 0.0
        %764 = vmatpush1.msra.mxu0 0.0
        %765 = vmatprep.subr.mxu0 0.0
        %766 = vmatpush1.msra.mxu0 0.0
        %767 = vmatprep.subr.mxu0 0.0
        %768 = vmatpush1.msra.mxu0 0.0
        %769 = vmatprep.subr.mxu0 0.0
        %770 = vmatpush1.msra.mxu0 0.0
        %771 = vmatprep.mubr.f32.mxu0 0.0
        %772 = vmatmul.mubr.f32.gmra.mrb[0].mxu0 %v696
        %v773 = vpop.f32.mrb[0].mxu0
        %v774 = vadd.f32 0.0, %v773
        %v775 = vpop.f32.mrb[0].mxu0
        %776 = vmatprep.mubr.f32.mxu0 0.0
        %777 = vmatmul.mubr.f32.gmra.mrb[0].mxu0 %v699
        %v778 = vpop.f32.mrb[0].mxu0
        %v779 = vadd.f32 0.0, %v778
        %v780 = vpop.f32.mrb[0].mxu0
        %781 = vmatprep.mubr.f32.mxu0 0.0
        %782 = vmatmul.mubr.f32.gmra.mrb[0].mxu0 %v702
        %v783 = vpop.f32.mrb[0].mxu0
        %v784 = vadd.f32 0.0, %v783
        %v785 = vpop.f32.mrb[0].mxu0
        %786 = vmatprep.mubr.f32.mxu0 0.0
        %787 = vmatmul.mubr.f32.gmra.mrb[0].mxu0 %v705
        %v788 = vpop.f32.mrb[0].mxu0
        %v789 = vadd.f32 0.0, %v788
        %v790 = vpop.f32.mrb[0].mxu0
        %791 = vdwg.mxu0
        %v792 = vld [vmem:[%s5] sm:$0xff]
        %v793 = vld [vmem:[%s5 + $0x8] sm:$0xff]
        %v794 = vld [vmem:[%s5 + $0x10] sm:$0xff]
        %v795 = vld [vmem:[%s5 + $0x18] sm:$0xff]
        %v796 = vld [vmem:[%s5 + $0x20] sm:$0xff]
        %v797 = vld [vmem:[%s5 + $0x28] sm:$0xff]
        %v798 = vld [vmem:[%s5 + $0x30] sm:$0xff]
        %v799 = vld [vmem:[%s5 + $0x38] sm:$0xff]
        %v800 = vld [vmem:[%s5 + $0x40] sm:$0xff]
        %v801 = vld [vmem:[%s5 + $0x48] sm:$0xff]
        %v802 = vld [vmem:[%s5 + $0x50] sm:$0xff]
        %v803 = vld [vmem:[%s5 + $0x58] sm:$0xff]
        %v804 = vld [vmem:[%s5 + $0x60] sm:$0xff]
        %v805 = vld [vmem:[%s5 + $0x68] sm:$0xff]
        %v806 = vld [vmem:[%s5 + $0x70] sm:$0xff]
        %v807 = vld [vmem:[%s5 + $0x78] sm:$0xff]
        %v809 = vsel %vm597, %v792, 0
        %v812 = vsel %vm597, %v793, 0
        %v815 = vsel %vm597, %v794, 0
        %v818 = vsel %vm597, %v795, 0
        %v821 = vsel %vm597, %v796, 0
        %v824 = vsel %vm597, %v797, 0
        %v827 = vsel %vm597, %v798, 0
        %v830 = vsel %vm597, %v799, 0
        %v833 = vsel %vm597, %v800, 0
        %v836 = vsel %vm597, %v801, 0
        %v839 = vsel %vm597, %v802, 0
        %v842 = vsel %vm597, %v803, 0
        %v845 = vsel %vm597, %v804, 0
        %v848 = vsel %vm597, %v805, 0
        %v851 = vsel %vm597, %v806, 0
        %v854 = vsel %vm597, %v807, 0
        %856 = vmatprep.subr.mxu0 0.0
        %857 = vmatpush1.msra.mxu0 %v774
        %858 = vmatprep.subr.mxu0 0.0
        %859 = vmatpush1.msra.mxu0 %v779
        %860 = vmatprep.subr.mxu0 0.0
        %861 = vmatpush1.msra.mxu0 %v784
        %862 = vmatprep.subr.mxu0 0.0
        %863 = vmatpush1.msra.mxu0 %v789
        %864 = vmatprep.subr.mxu0 0.0
        %865 = vmatpush1.msra.mxu0 0.0
        %866 = vmatprep.subr.mxu0 0.0
        %867 = vmatpush1.msra.mxu0 0.0
        %868 = vmatprep.subr.mxu0 0.0
        %869 = vmatpush1.msra.mxu0 0.0
        %870 = vmatprep.subr.mxu0 0.0
        %871 = vmatpush1.msra.mxu0 0.0
        %872 = vmatprep.subr.mxu0 0.0
        %873 = vmatpush1.msra.mxu0 0.0
        %874 = vmatprep.subr.mxu0 0.0
        %875 = vmatpush1.msra.mxu0 0.0
        %876 = vmatprep.subr.mxu0 0.0
        %877 = vmatpush1.msra.mxu0 0.0
        %878 = vmatprep.subr.mxu0 0.0
        %879 = vmatpush1.msra.mxu0 0.0
        %880 = vmatprep.subr.mxu0 0.0
        %881 = vmatpush1.msra.mxu0 0.0
        %882 = vmatprep.subr.mxu0 0.0
        %883 = vmatpush1.msra.mxu0 0.0
        %884 = vmatprep.subr.mxu0 0.0
        %885 = vmatpush1.msra.mxu0 0.0
        %886 = vmatprep.subr.mxu0 0.0
        %887 = vmatpush1.msra.mxu0 0.0
        %888 = vmatprep.subr.mxu0 0.0
        %889 = vmatpush1.msra.mxu0 0.0
        %890 = vmatprep.subr.mxu0 0.0
        %891 = vmatpush1.msra.mxu0 0.0
        %892 = vmatprep.subr.mxu0 0.0
        %893 = vmatpush1.msra.mxu0 0.0
        %894 = vmatprep.subr.mxu0 0.0
        %895 = vmatpush1.msra.mxu0 0.0
        %896 = vmatprep.subr.mxu0 0.0
        %897 = vmatpush1.msra.mxu0 0.0
        %898 = vmatprep.subr.mxu0 0.0
        %899 = vmatpush1.msra.mxu0 0.0
        %900 = vmatprep.subr.mxu0 0.0
        %901 = vmatpush1.msra.mxu0 0.0
        %902 = vmatprep.subr.mxu0 0.0
        %903 = vmatpush1.msra.mxu0 0.0
        %904 = vmatprep.subr.mxu0 0.0
        %905 = vmatpush1.msra.mxu0 0.0
        %906 = vmatprep.subr.mxu0 0.0
        %907 = vmatpush1.msra.mxu0 0.0
        %908 = vmatprep.subr.mxu0 0.0
        %909 = vmatpush1.msra.mxu0 0.0
        %910 = vmatprep.subr.mxu0 0.0
        %911 = vmatpush1.msra.mxu0 0.0
        %912 = vmatprep.subr.mxu0 0.0
        %913 = vmatpush1.msra.mxu0 0.0
        %914 = vmatprep.subr.mxu0 0.0
        %915 = vmatpush1.msra.mxu0 0.0
        %916 = vmatprep.subr.mxu0 0.0
        %917 = vmatpush1.msra.mxu0 0.0
        %918 = vmatprep.subr.mxu0 0.0
        %919 = vmatpush1.msra.mxu0 0.0
        %920 = vmatprep.mubr.f32.mxu0 0.0
        %921 = vmatmul.mubr.f32.gmra.mrb[0].mxu0 %v809
        %v922 = vpop.f32.mrb[0].mxu0
        %v923 = vadd.f32 0.0, %v922
        %v924 = vpop.f32.mrb[0].mxu0
        %925 = vmatprep.mubr.f32.mxu0 0.0
        %926 = vmatmul.mubr.f32.gmra.mrb[0].mxu0 %v812
        %v927 = vpop.f32.mrb[0].mxu0
        %v928 = vadd.f32 0.0, %v927
        %v929 = vpop.f32.mrb[0].mxu0
        %930 = vmatprep.mubr.f32.mxu0 0.0
        %931 = vmatmul.mubr.f32.gmra.mrb[0].mxu0 %v815
        %v932 = vpop.f32.mrb[0].mxu0
        %v933 = vadd.f32 0.0, %v932
        %v934 = vpop.f32.mrb[0].mxu0
        %935 = vmatprep.mubr.f32.mxu0 0.0
        %936 = vmatmul.mubr.f32.gmra.mrb[0].mxu0 %v818
        %v937 = vpop.f32.mrb[0].mxu0
        %v938 = vadd.f32 0.0, %v937
        %v939 = vpop.f32.mrb[0].mxu0
        %940 = vmatprep.mubr.f32.mxu0 0.0
        %941 = vmatmul.mubr.f32.gmra.mrb[0].mxu0 %v821
        %v942 = vpop.f32.mrb[0].mxu0
        %v943 = vadd.f32 0.0, %v942
        %v944 = vpop.f32.mrb[0].mxu0
        %945 = vmatprep.mubr.f32.mxu0 0.0
        %946 = vmatmul.mubr.f32.gmra.mrb[0].mxu0 %v824
        %v947 = vpop.f32.mrb[0].mxu0
        %v948 = vadd.f32 0.0, %v947
        %v949 = vpop.f32.mrb[0].mxu0
        %950 = vmatprep.mubr.f32.mxu0 0.0
        %951 = vmatmul.mubr.f32.gmra.mrb[0].mxu0 %v827
        %v952 = vpop.f32.mrb[0].mxu0
        %v953 = vadd.f32 0.0, %v952
        %v954 = vpop.f32.mrb[0].mxu0
        %955 = vmatprep.mubr.f32.mxu0 0.0
        %956 = vmatmul.mubr.f32.gmra.mrb[0].mxu0 %v830
        %v957 = vpop.f32.mrb[0].mxu0
        %v958 = vadd.f32 0.0, %v957
        %v959 = vpop.f32.mrb[0].mxu0
        %960 = vmatprep.mubr.f32.mxu0 0.0
        %961 = vmatmul.mubr.f32.gmra.mrb[0].mxu0 %v833
        %v962 = vpop.f32.mrb[0].mxu0
        %v963 = vadd.f32 0.0, %v962
        %v964 = vpop.f32.mrb[0].mxu0
        %965 = vmatprep.mubr.f32.mxu0 0.0
        %966 = vmatmul.mubr.f32.gmra.mrb[0].mxu0 %v836
        %v967 = vpop.f32.mrb[0].mxu0
        %v968 = vadd.f32 0.0, %v967
        %v969 = vpop.f32.mrb[0].mxu0
        %970 = vmatprep.mubr.f32.mxu0 0.0
        %971 = vmatmul.mubr.f32.gmra.mrb[0].mxu0 %v839
        %v972 = vpop.f32.mrb[0].mxu0
        %v973 = vadd.f32 0.0, %v972
        %v974 = vpop.f32.mrb[0].mxu0
        %975 = vmatprep.mubr.f32.mxu0 0.0
        %976 = vmatmul.mubr.f32.gmra.mrb[0].mxu0 %v842
        %v977 = vpop.f32.mrb[0].mxu0
        %v978 = vadd.f32 0.0, %v977
        %v979 = vpop.f32.mrb[0].mxu0
        %980 = vmatprep.mubr.f32.mxu0 0.0
        %981 = vmatmul.mubr.f32.gmra.mrb[0].mxu0 %v845
        %v982 = vpop.f32.mrb[0].mxu0
        %v983 = vadd.f32 0.0, %v982
        %v984 = vpop.f32.mrb[0].mxu0
        %985 = vmatprep.mubr.f32.mxu0 0.0
        %986 = vmatmul.mubr.f32.gmra.mrb[0].mxu0 %v848
        %v987 = vpop.f32.mrb[0].mxu0
        %v988 = vadd.f32 0.0, %v987
        %v989 = vpop.f32.mrb[0].mxu0
        %990 = vmatprep.mubr.f32.mxu0 0.0
        %991 = vmatmul.mubr.f32.gmra.mrb[0].mxu0 %v851
        %v992 = vpop.f32.mrb[0].mxu0
        %v993 = vadd.f32 0.0, %v992
        %v994 = vpop.f32.mrb[0].mxu0
        %995 = vmatprep.mubr.f32.mxu0 0.0
        %996 = vmatmul.mubr.f32.gmra.mrb[0].mxu0 %v854
        %v997 = vpop.f32.mrb[0].mxu0
        %v998 = vadd.f32 0.0, %v997
        %v999 = vpop.f32.mrb[0].mxu0
        %1000 = vdwg.mxu0
        %v1001 = vmul.f32 %v487, %v923
        %v1002 = vmul.f32 %v488, %v928
        %v1003 = vmul.f32 %v489, %v933
        %v1004 = vmul.f32 %v490, %v938
        %v1005 = vmul.f32 %v491, %v943
        %v1006 = vmul.f32 %v492, %v948
        %v1007 = vmul.f32 %v493, %v953
        %v1008 = vmul.f32 %v494, %v958
        %v1009 = vmul.f32 %v495, %v963
        %v1010 = vmul.f32 %v496, %v968
        %v1011 = vmul.f32 %v497, %v973
        %v1012 = vmul.f32 %v498, %v978
        %v1013 = vmul.f32 %v499, %v983
        %v1014 = vmul.f32 %v500, %v988
        %v1015 = vmul.f32 %v501, %v993
        %v1016 = vmul.f32 %v502, %v998
        %1017 = vst.msk [vmem:[%s359] sm:$0xff] %vm376, %v1001
        %1018 = vst.msk [vmem:[%s359 + $0x8] sm:$0xff] %vm376, %v1002
        %1019 = vst.msk [vmem:[%s359 + $0x10] sm:$0xff] %vm376, %v1003
        %1020 = vst.msk [vmem:[%s359 + $0x18] sm:$0xff] %vm376, %v1004
        %1021 = vst.msk [vmem:[%s359 + $0x20] sm:$0xff] %vm376, %v1005
        %1022 = vst.msk [vmem:[%s359 + $0x28] sm:$0xff] %vm376, %v1006
        %1023 = vst.msk [vmem:[%s359 + $0x30] sm:$0xff] %vm376, %v1007
        %1024 = vst.msk [vmem:[%s359 + $0x38] sm:$0xff] %vm376, %v1008
        %1025 = vst.msk [vmem:[%s359 + $0x40] sm:$0xff] %vm376, %v1009
        %1026 = vst.msk [vmem:[%s359 + $0x48] sm:$0xff] %vm376, %v1010
        %1027 = vst.msk [vmem:[%s359 + $0x50] sm:$0xff] %vm376, %v1011
        %1028 = vst.msk [vmem:[%s359 + $0x58] sm:$0xff] %vm376, %v1012
        %1029 = vst.msk [vmem:[%s359 + $0x60] sm:$0xff] %vm376, %v1013
        %1030 = vst.msk [vmem:[%s359 + $0x68] sm:$0xff] %vm376, %v1014
        %1031 = vst.msk [vmem:[%s359 + $0x70] sm:$0xff] %vm376, %v1015
        %1032 = vst.msk [vmem:[%s359 + $0x78] sm:$0xff] %vm376, %v1016
        %1033 = vst.msk [vmem:[%s334] sm:$0xff] %vm376, %v774
        %1034 = vst.msk [vmem:[%s334 + $0x8] sm:$0xff] %vm376, %v779
        %1035 = vst.msk [vmem:[%s334 + $0x10] sm:$0xff] %vm376, %v784
        %1036 = vst.msk [vmem:[%s334 + $0x18] sm:$0xff] %vm376, %v789
        %p1037 = scmp.lt.s32.totalorder %s26, 1
        %s1038 = scalar_select %p1037, %s26, 1
        %p1039 = scmp.lt.s32.totalorder %s27, 0
        %s1040 = scalar_select %p1039, %s27, 0
        %s1041 = smul.addr %s1038, 16
        %s1042 = sadd.s32 %s1040, %s1041
        %s1043 = smul.addr %s1042, 8
        %s1044 = scalar_lea.vmem %s6, %s1043
        %s1045 = sand.u32 %s215, 1
        %s1046 = scalar_lea.sflag [#allocation3], %s1045
        %s1047 = sand.u32 %s215, 1
        %s1048 = smul.addr %s1047, 32
        %s1049 = scalar_lea.vmem [#allocation2], %s1048
        // Predicated region
        $region45: #{tpu_custom_call.1} parent=43 // pred_check
          %p1050 = pneg %p197
        $region46: #{tpu_custom_call.1} parent=43 // pred_check_branch
          %1052 = sbr.rel (%p1050) target = $region48
        $region47: #{tpu_custom_call.1} parent=43 // pred_region
          _
        $region48: #{tpu_custom_call.1} parent=43 // pred_fallthru
          _
        // Predicated region
        $region49: #{tpu_custom_call.1} parent=43 // pred_check
          %p1053 = pneg %p225
        $region50: #{tpu_custom_call.1} parent=43 // pred_check_branch
          %1055 = sbr.rel (%p1053) target = $region52
        $region51: #{tpu_custom_call.1} parent=43 // pred_region
          %s1057 = ssub.s32 512, 512
          %1058 = vsyncadd %s1046, %s1057
          %s1059 = smul.addr %s26, 4
          %s1060 = sadd.s32 %s27, %s1059
          %s1061 = smul.addr %s1060, 128
          %s1062 = scalar_lea.hbm %s7, %s1061
          %s1063 = sshll.u32 %s1049, 4
          %s1064 = int_to_ptr.vmem [resolvable:$true] %s1063
          %1069 = dma.vmem_to_hbm [thread:$0]  %s1064, 512, %s1062, %s1046, 128, 128, 8
        $region52: #{tpu_custom_call.1} parent=43 // pred_fallthru
          _
      $region44: #{tpu_custom_call.1} parent=5 // pred_fallthru
        _
      %p1070 = scmp.le.s32.totalorder 2, %s17
      // Predicated region
      $region53: #{tpu_custom_call.1} parent=5 // pred_check
        %p1071 = pneg %p1070
      $region54: #{tpu_custom_call.1} parent=5 // pred_check_branch
        %1073 = sbr.rel (%p1071) target = $region56
      $region55: #{tpu_custom_call.1} parent=5 // pred_region
        %s1074 = ssub.s32 %s17, 2
        // Predicated region
        $region57: #{tpu_custom_call.1} parent=55 // pred_check
          %p1075 = pneg %p203
        $region58: #{tpu_custom_call.1} parent=55 // pred_check_branch
          %1077 = sbr.rel (%p1075) target = $region60
        $region59: #{tpu_custom_call.1} parent=55 // pred_region
          %p1078 = scmp.lt.s32.totalorder %s28, 1
          %s1079 = scalar_select %p1078, %s28, 1
          %p1080 = scmp.lt.s32.totalorder %s29, 0
          %s1081 = scalar_select %p1080, %s29, 0
          %s1082 = smul.addr %s1079, 16
          %s1083 = sadd.s32 %s1081, %s1082
          %s1084 = smul.addr %s1083, 8
          %s1085 = scalar_lea.vmem %s6, %s1084
        $region60: #{tpu_custom_call.1} parent=55 // pred_fallthru
          _
        // Predicated region
        $region61: #{tpu_custom_call.1} parent=55 // pred_check
          %p1086 = pneg %p231
        $region62: #{tpu_custom_call.1} parent=55 // pred_check_branch
          %1088 = sbr.rel (%p1086) target = $region64
        $region63: #{tpu_custom_call.1} parent=55 // pred_region
          %s1089 = sand.u32 %s216, 1
          %s1090 = scalar_lea.sflag [#allocation3], %s1089
          %s1091 = sand.u32 %s216, 1
          %s1092 = smul.addr %s1091, 32
          %s1093 = scalar_lea.vmem [#allocation2], %s1092
          %1094 = dma.done %s1090, 512
        $region64: #{tpu_custom_call.1} parent=55 // pred_fallthru
          _
      $region56: #{tpu_custom_call.1} parent=5 // pred_fallthru
        _
    $region6: #{tpu_custom_call.1} parent=1 // loop_footer
      %s21 = sadd.s32 1, %s17
    $region7: #{tpu_custom_call.1} parent=1 // loop_footer_branch
      %16 = sbr.rel target = $region3
    $region8: #{tpu_custom_call.1} parent=1 // loop_exit
      _
    %1095 = vsyncpa [#allocation3], 1
    %s1096 = scalar_lea.sflag [#allocation3], 1
    %1097 = vsyncpa %s1096, 1

</llo_original>
